<compile_context>
chip_gen: v7x
topology: tpu7x:2x2x1
jax: 0.10.0
libtpu: 0.0.40
codegen_flags: <defaults>
</compile_context>

<pallas_src>
import jax
import jax.numpy as jnp
from jax import lax
from jax.experimental import pallas as pl
from jax.experimental.pallas import tpu as pltpu

EPS = 1e-5
LANE = 128            # output-channel padding -> lane-dense stores
ROW_TILE_CAP = 1024   # max rows per grid step (VMEM-safe on v5e/v6e/v7x)


def _ceil_to(x, m):
    return ((x + m - 1) // m) * m


def _row_tile(m, cap=ROW_TILE_CAP):
    for t in (2048, 1024, 512, 256, 128, 64, 32, 16, 8):
        if t <= cap and m % t == 0:
            return t
    return 8  # fallback: caller zero-pads rows (padded rows contribute 0)


# ----------------------------- Pallas kernels -----------------------------
def _matmul_bn_kernel(a_ref, w_ref, y_ref, stats_ref):
    # a: (1, TM, K) bf16, w: (1, K, C) bf16 -> y: (1, TM, C) bf16
    # stats: (8, C) f32, row 0 = per-column sum, row 1 = per-column sum of sq.
    y = jnp.dot(a_ref[0], w_ref[0], preferred_element_type=jnp.float32)
    y_ref[0] = y.astype(y_ref.dtype)
    s = jnp.sum(y, axis=0, keepdims=True)
    sq = jnp.sum(y * y, axis=0, keepdims=True)
    row = lax.broadcasted_iota(jnp.int32, stats_ref.shape, 0)
    stats_ref[...] = jnp.where(row == 0, s, jnp.where(row == 1, sq, 0.0))


def _matmul_bias_tanh_kernel(a_ref, w_ref, b_ref, y_ref):
    y = jnp.dot(a_ref[0], w_ref[0], preferred_element_type=jnp.float32)
    y_ref[0] = jnp.tanh(y + b_ref[...]).astype(y_ref.dtype)


def _affine_relu_kernel(x_ref, sc_ref, sh_ref, o_ref):
    y = x_ref[...].astype(jnp.float32) * sc_ref[...] + sh_ref[...]
    o_ref[...] = jnp.maximum(y, 0.0).astype(o_ref.dtype)


# ----------------------------- Pallas wrappers -----------------------------
def conv_matmul_bn(a, w):
    """a: (P, M, K) bf16, w: (P, K, C) bf16 (C multiple of 128).
    Returns y: (P, Mp, C) bf16 and fused per-tile BN stats (P*nt*8, C) f32."""
    P, M, K = a.shape
    C = w.shape[2]
    tm = _row_tile(M)
    Mp = _ceil_to(M, tm)
    if Mp != M:
        a = jnp.pad(a, ((0, 0), (0, Mp - M), (0, 0)))
    nt = Mp // tm
    return pl.pallas_call(
        _matmul_bn_kernel,
        out_shape=(jax.ShapeDtypeStruct((P, Mp, C), jnp.bfloat16),
                   jax.ShapeDtypeStruct((P * nt * 8, C), jnp.float32)),
        grid=(P, nt),
        in_specs=[pl.BlockSpec((1, tm, K), lambda p, i: (p, i, 0)),
                  pl.BlockSpec((1, K, C), lambda p, i: (p, 0, 0))],
        out_specs=(pl.BlockSpec((1, tm, C), lambda p, i: (p, i, 0)),
                   pl.BlockSpec((8, C), lambda p, i: (p * nt + i, 0))),
        compiler_params=pltpu.CompilerParams(
            dimension_semantics=("parallel", "parallel")),
    )(a, w)


def conv_matmul_bias_tanh(a, w, bias):
    """Final layer: matmul with fused bias + tanh epilogue."""
    P, M, K = a.shape
    C = w.shape[2]
    tm = _row_tile(M)
    Mp = _ceil_to(M, tm)
    if Mp != M:
        a = jnp.pad(a, ((0, 0), (0, Mp - M), (0, 0)))
    nt = Mp // tm
    return pl.pallas_call(
        _matmul_bias_tanh_kernel,
        out_shape=jax.ShapeDtypeStruct((P, Mp, C), jnp.float32),
        grid=(P, nt),
        in_specs=[pl.BlockSpec((1, tm, K), lambda p, i: (p, i, 0)),
                  pl.BlockSpec((1, K, C), lambda p, i: (p, 0, 0)),
                  pl.BlockSpec((1, C), lambda p, i: (0, 0))],
        out_specs=pl.BlockSpec((1, tm, C), lambda p, i: (p, i, 0)),
        compiler_params=pltpu.CompilerParams(
            dimension_semantics=("parallel", "parallel")),
    )(a, w, bias)


def affine_relu(x, scale, shift):
    """Per-channel y = relu(x*scale + shift); x: (M, C) bf16 -> bf16."""
    M, C = x.shape
    tm = _row_tile(M, cap=2048)
    Mp = _ceil_to(M, tm)
    if Mp != M:
        x = jnp.pad(x, ((0, Mp - M), (0, 0)))
    out = pl.pallas_call(
        _affine_relu_kernel,
        out_shape=jax.ShapeDtypeStruct((Mp, C), jnp.bfloat16),
        grid=(Mp // tm,),
        in_specs=[pl.BlockSpec((tm, C), lambda i: (i, 0)),
                  pl.BlockSpec((1, C), lambda i: (0, 0)),
                  pl.BlockSpec((1, C), lambda i: (0, 0))],
        out_specs=pl.BlockSpec((tm, C), lambda i: (i, 0)),
        compiler_params=pltpu.CompilerParams(
            dimension_semantics=("parallel",)),
    )(x, scale.reshape(1, C).astype(jnp.float32),
      shift.reshape(1, C).astype(jnp.float32))
    return out[:M]


# --------------------- ConvTranspose2d data preparation ---------------------
def _im2col_stride1(x, padding, k=4):
    """Generic stride-1 ConvTranspose2d im2col (used by the 1x1 -> 4x4 layer)."""
    N, Cin, H, W = x.shape
    pad = k - 1 - padding
    OH = H + k - 1 - 2 * padding
    OW = W + k - 1 - 2 * padding
    xp = jnp.pad(x, ((0, 0), (0, 0), (pad, pad), (pad, pad))).astype(jnp.bfloat16)
    patches = [xp[:, :, kh:kh + OH, kw:kw + OW]
               for kh in range(k) for kw in range(k)]
    p = jnp.stack(patches, axis=0).reshape(k, k, N, Cin, OH, OW)
    p = jnp.transpose(p, (2, 4, 5, 3, 0, 1)).reshape(1, N * OH * OW, Cin * k * k)
    return p, (N, OH, OW)


def _weights_stride1(w, k=4):
    Cin, Cout = w.shape[0], w.shape[1]
    wf = w[:, :, ::-1, ::-1]                        # correlation form
    return jnp.transpose(wf, (0, 2, 3, 1)).reshape(1, Cin * k * k, Cout)


def _phase_patches(x):
    """Sub-pixel decomposition of stride=2, k=4, pad=1 ConvTranspose2d: gather
    only the 4 non-zero taps of each output phase. -> (4, N*H*W, Cin*4) bf16."""
    N, Cin, H, W = x.shape
    xp = jnp.pad(x, ((0, 0), (0, 0), (1, 1), (1, 1))).astype(jnp.bfloat16)
    phases = []
    for a in range(2):
        for b in range(2):
            taps = [xp[:, :, a + th:a + th + H, b + tw:b + tw + W]
                    for th in range(2) for tw in range(2)]
            t = jnp.stack(taps, axis=0).reshape(2, 2, N, Cin, H, W)
            t = jnp.transpose(t, (2, 4, 5, 3, 0, 1)).reshape(N * H * W, Cin * 4)
            phases.append(t)
    return jnp.stack(phases, axis=0), (N, H, W)


def _phase_weights(w):
    """Per-phase weights (4, Cin*4, Cout); phase = 2*a + b, tap kh' = 2*th + a
    in flipped/correlation coordinates (matches _phase_patches ordering)."""
    Cin, Cout = w.shape[0], w.shape[1]
    wf = w[:, :, ::-1, ::-1]
    ws = []
    for a in range(2):
        for b in range(2):
            wp = wf[:, :, a::2, b::2]               # (Cin, Cout, 2, 2)
            ws.append(jnp.transpose(wp, (0, 2, 3, 1)).reshape(Cin * 4, Cout))
    return jnp.stack(ws, axis=0)


def _phase_to_nchw(y, N, H, W, Cout):
    """(4, >=N*H*W, Cp) phase-major rows -> (N, Cout, 2H, 2W)."""
    y = y[:, :N * H * W, :Cout].reshape(2, 2, N, H, W, Cout)
    y = jnp.transpose(y, (2, 5, 3, 0, 4, 1))        # (N, C, H, a, W, b)
    return y.reshape(N, Cout, 2 * H, 2 * W)


def _rows_to_nchw(y, N, OH, OW, Cout):
    return jnp.transpose(y[0, :N * OH * OW, :Cout].reshape(N, OH, OW, Cout),
                         (0, 3, 1, 2))


# ----------------------------- Generator blocks -----------------------------
def gen_block(x, w, gamma, beta, stride, padding):
    """ConvTranspose2d(bias=False) -> BatchNorm2d(batch stats) -> ReLU."""
    Cout = w.shape[1]
    Cp = _ceil_to(Cout, LANE)
    if stride == 1:
        a, (N, OH, OW) = _im2col_stride1(x, padding)
        wm = _weights_stride1(w)
    else:
        a, (N, H, W) = _phase_patches(x)
        wm = _phase_weights(w)
    wm = jnp.pad(wm, ((0, 0), (0, 0), (0, Cp - Cout))).astype(jnp.bfloat16)

    P, M, _ = a.shape
    y, stats = conv_matmul_bn(a, wm)            # y: (P, Mp, Cp) bf16
    # finish BN statistics on tiny (Cp,) vectors (one-pass E[y^2] - E[y]^2)
    st = stats.reshape(-1, 8, Cp)
    n = P * M                                   # true number of output pixels
    mean = jnp.sum(st[:, 0, :], axis=0) / n
    var = jnp.maximum(jnp.sum(st[:, 1, :], axis=0) / n - mean * mean, 0.0)
    scale = jnp.pad(gamma, (0, Cp - Cout)) * lax.rsqrt(var + EPS)
    shift = jnp.pad(beta, (0, Cp - Cout)) - mean * scale

    Pp, Mp, _ = y.shape
    act = affine_relu(y.reshape(Pp * Mp, Cp), scale, shift).reshape(Pp, Mp, Cp)
    if stride == 1:
        return _rows_to_nchw(act, N, OH, OW, Cout)
    return _phase_to_nchw(act, N, H, W, Cout)


def final_layer(x, w, b):
    """ConvTranspose2d(stride=2, pad=1, bias=True) -> Tanh (fully fused)."""
    Cout = w.shape[1]
    Cp = _ceil_to(Cout, LANE)
    a, (N, H, W) = _phase_patches(x)
    wm = jnp.pad(_phase_weights(w),
                 ((0, 0), (0, 0), (0, Cp - Cout))).astype(jnp.bfloat16)
    bp = jnp.pad(b, (0, Cp - Cout)).reshape(1, Cp).astype(jnp.float32)
    y = conv_matmul_bias_tanh(a, wm, bp)        # (4, Mp, Cp) f32
    return _phase_to_nchw(y, N, H, W, Cout)


# ----------------------------- Generator -----------------------------
LAYER_CFG = [(1, 0), (2, 1), (2, 1), (2, 1), (2, 1)]   # (stride, padding)


def init_params(key, noise_dim, channels, fg):
    chans = [(noise_dim, fg * 16), (fg * 16, fg * 8), (fg * 8, fg * 4),
             (fg * 4, fg * 2), (fg * 2, fg)]
    keys = jax.random.split(key, len(chans) + 2)
    blocks = []
    for i, (cin, cout) in enumerate(chans):
        w = jax.random.normal(keys[i], (cin, cout, 4, 4), jnp.float32) * 0.02
        blocks.append((w, jnp.ones((cout,), jnp.float32),
                       jnp.zeros((cout,), jnp.float32)))
    fw = jax.random.normal(keys[-2], (fg, channels, 4, 4), jnp.float32) * 0.02
    fb = jax.random.normal(keys[-1], (channels,), jnp.float32) * 0.02
    return {"blocks": blocks, "final_w": fw, "final_b": fb}


@jax.jit
def generator_forward(z, params):
    x = z
    for (w, gamma, beta), (s, p) in zip(params["blocks"], LAYER_CFG):
        x = gen_block(x, w, gamma, beta, s, p)
    return final_layer(x, params["final_w"], params["final_b"])


# ----------------------------- reference (self-check) -----------------------------
def _ref_conv_transpose(x, w, stride, padding):
    """Dense reference: ConvTranspose2d == lhs-dilated conv with flipped kernel."""
    k = w.shape[2]
    wf = jnp.transpose(w[:, :, ::-1, ::-1], (1, 0, 2, 3))  # (Cout, Cin, k, k)
    pad = k - 1 - padding
    return lax.conv_general_dilated(
        x, wf, window_strides=(1, 1), padding=[(pad, pad), (pad, pad)],
        lhs_dilation=(stride, stride),
        dimension_numbers=("NCHW", "OIHW", "NCHW"))


# ----------------------------- main -----------------------------
if __name__ == "__main__":
    key = jax.random.PRNGKey(0)
    noise_dim, channels, features_gen, batch = 8, 3, 4, 2

    pkey, zkey, ck1, ck2 = jax.random.split(key, 4)

    # small self-check: phase-decomposed stride-2 transposed conv vs dense ref
    xt = jax.random.normal(ck1, (2, 8, 4, 4), jnp.float32)
    wt = jax.random.normal(ck2, (8, 16, 4, 4), jnp.float32) * 0.02
    at, (n_, h_, w_) = _phase_patches(xt)
    wmt = jnp.pad(_phase_weights(wt),
                  ((0, 0), (0, 0), (0, LANE - 16))).astype(jnp.bfloat16)
    yt, _ = conv_matmul_bn(at, wmt)
    mine = _phase_to_nchw(yt.astype(jnp.float32), n_, h_, w_, 16)
    ref = _ref_conv_transpose(xt, wt, 2, 1)
    assert float(jnp.max(jnp.abs(mine - ref))) < 2e-2, "phase conv mismatch"

    params = init_params(pkey, noise_dim, channels, features_gen)
    z = jax.random.normal(zkey, (batch, noise_dim, 1, 1), jnp.float32)

    out = generator_forward(z, params)
    out = jax.block_until_ready(out)

    assert out.shape == (batch, channels, 128, 128), out.shape
    assert bool(jnp.all(jnp.isfinite(out)))
    assert bool(jnp.all(jnp.abs(out) <= 1.0 + 1e-6))  # Tanh output range
    print("KERNEL_OK")
</pallas_src>

<mosaic_0001>
module attributes {stable_mosaic.version = 11 : i64} {
  func.func @_matmul_bn_kernel(%arg0: i32, %arg1: i32, %arg2: memref<1x32x32xbf16, #tpu.memory_space<vmem>>, %arg3: memref<1x32x128xbf16, #tpu.memory_space<vmem>>, %arg4: memref<1x32x128xbf16, #tpu.memory_space<vmem>>, %arg5: memref<8x128xf32, #tpu.memory_space<vmem>>) attributes {dimension_semantics = [#tpu.dimension_semantics<parallel>, #tpu.dimension_semantics<parallel>], iteration_bounds = array<i64: 4, 1>, scalar_prefetch = 0 : i64, scratch_operands = 0 : i64, tpu.core_type = #tpu.core_type<tc>, window_params = [{transform_indices = @transform_0, window_bounds = array<i64: 1, 32, 32>}, {transform_indices = @transform_1, window_bounds = array<i64: 1, 32, 128>}, {transform_indices = @transform_2, window_bounds = array<i64: 1, 32, 128>}, {transform_indices = @transform_3, window_bounds = array<i64: 8, 128>}]} {
    %c0 = arith.constant 0 : index
    %c0_0 = arith.constant 0 : index
    %c0_1 = arith.constant 0 : index
    %0 = vector.load %arg2[%c0, %c0_0, %c0_1] : memref<1x32x32xbf16, #tpu.memory_space<vmem>>, vector<1x32x32xbf16>
    %1 = vector.shape_cast %0 : vector<1x32x32xbf16> to vector<32x32xbf16>
    %c0_2 = arith.constant 0 : index
    %c0_3 = arith.constant 0 : index
    %c0_4 = arith.constant 0 : index
    %2 = vector.load %arg3[%c0_2, %c0_3, %c0_4] : memref<1x32x128xbf16, #tpu.memory_space<vmem>>, vector<1x32x128xbf16>
    %3 = vector.shape_cast %2 : vector<1x32x128xbf16> to vector<32x128xbf16>
    %cst = arith.constant dense<0.000000e+00> : vector<32x128xf32>
    %4 = tpu.matmul %1, %3, %cst {dimension_numbers = #tpu.dot_dimension_numbers<[1], [0], [0], [1], [0, 0, 1, 1], [], []>} : vector<32x32xbf16>, vector<32x128xbf16>, vector<32x128xf32> -> vector<32x128xf32>
    %5 = arith.truncf %4 : vector<32x128xf32> to vector<32x128xbf16>
    %c0_5 = arith.constant 0 : index
    %c0_6 = arith.constant 0 : index
    %c0_7 = arith.constant 0 : index
    %6 = vector.load %arg4[%c0_5, %c0_6, %c0_7] : memref<1x32x128xbf16, #tpu.memory_space<vmem>>, vector<1x32x128xbf16>
    %7 = vector.shape_cast %6 : vector<1x32x128xbf16> to vector<32x128xbf16>
    %8 = vector.shape_cast %5 : vector<32x128xbf16> to vector<1x32x128xbf16>
    tpu.vector_store %arg4[%c0_5, %c0_6, %c0_7], %8 {strides = array<i32>} : memref<1x32x128xbf16, #tpu.memory_space<vmem>>, vector<1x32x128xbf16>,
    %cst_8 = arith.constant dense<0.000000e+00> : vector<128xf32>
    %9 = vector.multi_reduction <add>, %4, %cst_8 [0] : vector<32x128xf32> to vector<128xf32>
    %10 = vector.shape_cast %9 : vector<128xf32> to vector<1x128xf32>
    %11 = arith.mulf %4, %4 : vector<32x128xf32>
    %cst_9 = arith.constant dense<0.000000e+00> : vector<128xf32>
    %12 = vector.multi_reduction <add>, %11, %cst_9 [0] : vector<32x128xf32> to vector<128xf32>
    %13 = vector.shape_cast %12 : vector<128xf32> to vector<1x128xf32>
    %14 = tpu.iota {dimensions = array<i32: 0>} : vector<8x128xi32>
    %c0_i32 = arith.constant 0 : i32
    %15 = vector.broadcast %c0_i32 : i32 to vector<8x128xi32>
    %16 = arith.cmpi eq, %14, %15 : vector<8x128xi32>
    %c1_i32 = arith.constant 1 : i32
    %17 = vector.broadcast %c1_i32 : i32 to vector<8x128xi32>
    %18 = arith.cmpi eq, %14, %17 : vector<8x128xi32>
    %cst_10 = arith.constant 0.000000e+00 : f32
    %19 = vector.shape_cast %13 : vector<1x128xf32> to vector<1x128xf32>
    %20 = vector.broadcast %19 : vector<1x128xf32> to vector<8x128xf32>
    %21 = vector.broadcast %cst_10 : f32 to vector<8x128xf32>
    %22 = arith.select %18, %20, %21 : vector<8x128xi1>, vector<8x128xf32>
    %23 = vector.shape_cast %10 : vector<1x128xf32> to vector<1x128xf32>
    %24 = vector.broadcast %23 : vector<1x128xf32> to vector<8x128xf32>
    %25 = arith.select %16, %24, %22 : vector<8x128xi1>, vector<8x128xf32>
    %c0_11 = arith.constant 0 : index
    %c0_12 = arith.constant 0 : index
    %26 = vector.load %arg5[%c0_11, %c0_12] : memref<8x128xf32, #tpu.memory_space<vmem>>, vector<8x128xf32>
    tpu.vector_store %arg5[%c0_11, %c0_12], %25 {strides = array<i32>} : memref<8x128xf32, #tpu.memory_space<vmem>>, vector<8x128xf32>,
    return
  }
  func.func @transform_0(%arg0: i32, %arg1: i32) -> (i32, i32, i32) {
    %c0_i32 = arith.constant 0 : i32
    %c0_i32_0 = arith.constant 0 : i32
    return %arg0, %arg1, %c0_i32 : i32, i32, i32
  }
  func.func @transform_1(%arg0: i32, %arg1: i32) -> (i32, i32, i32) {
    %c0_i32 = arith.constant 0 : i32
    %c0_i32_0 = arith.constant 0 : i32
    %c0_i32_1 = arith.constant 0 : i32
    return %arg0, %c0_i32, %c0_i32_0 : i32, i32, i32
  }
  func.func @transform_2(%arg0: i32, %arg1: i32) -> (i32, i32, i32) {
    %c0_i32 = arith.constant 0 : i32
    %c0_i32_0 = arith.constant 0 : i32
    return %arg0, %arg1, %c0_i32 : i32, i32, i32
  }
  func.func @transform_3(%arg0: i32, %arg1: i32) -> (i32, i32) {
    %c1_i32 = arith.constant 1 : i32
    %0 = arith.muli %arg0, %c1_i32 : i32
    %1 = arith.addi %0, %arg1 : i32
    %c0_i32 = arith.constant 0 : i32
    %c0_i32_0 = arith.constant 0 : i32
    return %1, %c0_i32 : i32, i32
  }
}

</mosaic_0001>

<llo_original>
// kernel: tpu_custom_call.1
$region0: #{tpu_custom_call.1}
  #allocation0 [shape = 'u32[]', space=smem, size = 0x4, offset = 0x4, fixed_abs, tag = 'smem constant byte address 0x4 - core index']
  #allocation1 [shape = 'u32[144,128]{1,0:T(1,128)}', space=vmem, size = 0x12000, scoped, tag = 'internal scratch']
  %s0 = inlined_call_operand.hbm [shape: bf16[4,32,32], index: 0, kind: input, shape index: {}]
  %s1 = inlined_call_operand.hbm [shape: bf16[4,32,128], index: 1, kind: input, shape index: {}]
  %s2 = inlined_call_operand.hbm [shape: bf16[4,32,128], index: 2, kind: output, shape index: {0}]
  %s3 = inlined_call_operand.hbm [shape: f32[32,128], index: 3, kind: output, shape index: {1}]
  %4 = xla_tuple %s2, %s3
  %s5 = sld [smem:[#allocation0]]
  $region57: #{tpu_custom_call.1} parent=0
    _
  %s7 = ssub.s32 1, %s5
  %s8 = scalar_select 0, %s7, %s5
  $region1: #{tpu_custom_call.1} parent=0
    #allocation2 [shape = 'u8[16384]{0}', space=vmem, size = 0x4000, scoped, tag = 'input window, operand 0']
    #allocation3 [shape = 's32[2]{0}', space=sflag, size = 0x8, scoped, tag = 'scoped memory for tpu_custom_call.1']
    #allocation4 [shape = 's32[2]{0}', space=sflag, size = 0x8, scoped, tag = 'scoped memory for tpu_custom_call.1']
    #allocation5 [shape = 'u8[16384]{0}', space=vmem, size = 0x4000, scoped, tag = 'input window, operand 1']
    #allocation6 [shape = 's32[2]{0}', space=sflag, size = 0x8, scoped, tag = 'scoped memory for tpu_custom_call.1']
    #allocation7 [shape = 'u8[16384]{0}', space=vmem, size = 0x4000, scoped, tag = 'output window, operand 0']
    #allocation8 [shape = 'u8[8192]{0}', space=vmem, size = 0x2000, scoped, tag = 'output window, operand 1']
    #allocation9 [shape = 's32[2]{0}', space=sflag, size = 0x8, scoped, tag = 'scoped memory for tpu_custom_call.1']
    %9 = vsyncpa [#allocation3], 0
    %s10 = scalar_lea.sflag [#allocation3], 1
    %11 = vsyncpa %s10, 0
    %12 = vsyncpa [#allocation6], 0
    %s13 = scalar_lea.sflag [#allocation6], 1
    %14 = vsyncpa %s13, 0
    %15 = vsyncpa [#allocation4], 0
    %s16 = scalar_lea.sflag [#allocation4], 1
    %17 = vsyncpa %s16, 0
    %18 = vsyncpa [#allocation9], 0
    %s19 = scalar_lea.sflag [#allocation9], 1
    %20 = vsyncpa %s19, 0
    loop: start=0, step=1, limit=6
    $region2: #{tpu_custom_call.1} parent=1 // loop_pre_header
      _
    $region3: #{tpu_custom_call.1} parent=1 // loop_header
      %s22 = sphi 0, %s26
      %p23 = scmp.ge.s32.totalorder %s22, 6
      %s29 = sphi 0, %s41
      %s30 = sphi 0, %s37
      %s31 = sphi 0, %s29
      %s32 = sphi 0, %s30
      %s33 = sphi 0, %s31
      %s34 = sphi 0, %s32
      %s46 = sphi 0, %s48
      %s49 = sphi 0, %s46
      %s50 = sphi 0, %s49
      %s66 = sphi 0, %s50
      %s72 = sphi 0, %s74
      %s75 = sphi 0, %s72
      %s76 = sphi 0, %s75
      %s92 = sphi 0, %s76
      %s100 = sphi 0, %s102
      %s103 = sphi 0, %s100
      %s104 = sphi 0, %s103
      %s120 = sphi 0, %s104
      %s128 = sphi 0, %s130
      %s131 = sphi 0, %s128
      %s132 = sphi 0, %s131
      %s148 = sphi 0, %s132
    $region4: #{tpu_custom_call.1} parent=1 // loop_header_branch
      %25 = sbr.rel (%p23) target = $region8
    $region5: #{tpu_custom_call.1} parent=1 // loop_body
      %s27 = ssub.s32 %s22, 1
      %s28 = ssub.s32 %s22, 2
      %s35 = sadd.s32 1, %s30
      %p36 = scmp.ge.s32.totalorder %s35, 1
      %s37 = scalar_select %p36, 0, %s35
      %s38 = sadd.s32 1, %s29
      %s39 = scalar_select %p36, %s38, %s29
      %p40 = scmp.ge.s32.totalorder %s39, 4
      %s41 = scalar_select %p40, 0, %s39
      %s42 = ssub.s32 %s29, %s41
      %s43 = ssub.s32 %s30, %s37
      %s44 = sor.u32 %s42, %s43
      %p45 = scmp.eq.s32.totalorder %s44, 0
      %s47 = sadd.s32 %s46, 1
      %s48 = scalar_select %p45, %s46, %s47
      %p51 = pneg %p45
      %p52 = scmp.eq.s32.totalorder %s22, 3
      %p53 = por %p51, %p52
      %p54 = scmp.ne.s32.totalorder %s46, %s49
      %p55 = scmp.eq.s32.totalorder %s22, 0
      %p56 = por %p54, %p55
      %p57 = scmp.ne.s32.totalorder %s46, %s49
      %p58 = scmp.eq.s32.totalorder %s27, 3
      %p59 = por %p57, %p58
      %p60 = scmp.ne.s32.totalorder %s49, %s50
      %p61 = scmp.eq.s32.totalorder %s27, 0
      %p62 = por %p60, %p61
      %p63 = scmp.ne.s32.totalorder %s49, %s50
      %p64 = scmp.eq.s32.totalorder %s28, 3
      %p65 = por %p63, %p64
      %p67 = scmp.ne.s32.totalorder %s50, %s66
      %p68 = scmp.eq.s32.totalorder %s28, 0
      %p69 = por %p67, %p68
      %s70 = ssub.s32 %s29, %s41
      %p71 = scmp.eq.s32.totalorder %s70, 0
      %s73 = sadd.s32 %s72, 1
      %s74 = scalar_select %p71, %s72, %s73
      %p77 = pneg %p71
      %p78 = scmp.eq.s32.totalorder %s22, 3
      %p79 = por %p77, %p78
      %p80 = scmp.ne.s32.totalorder %s72, %s75
      %p81 = scmp.eq.s32.totalorder %s22, 0
      %p82 = por %p80, %p81
      %p83 = scmp.ne.s32.totalorder %s72, %s75
      %p84 = scmp.eq.s32.totalorder %s27, 3
      %p85 = por %p83, %p84
      %p86 = scmp.ne.s32.totalorder %s75, %s76
      %p87 = scmp.eq.s32.totalorder %s27, 0
      %p88 = por %p86, %p87
      %p89 = scmp.ne.s32.totalorder %s75, %s76
      %p90 = scmp.eq.s32.totalorder %s28, 3
      %p91 = por %p89, %p90
      %p93 = scmp.ne.s32.totalorder %s76, %s92
      %p94 = scmp.eq.s32.totalorder %s28, 0
      %p95 = por %p93, %p94
      %s96 = ssub.s32 %s29, %s41
      %s97 = ssub.s32 %s30, %s37
      %s98 = sor.u32 %s96, %s97
      %p99 = scmp.eq.s32.totalorder %s98, 0
      %s101 = sadd.s32 %s100, 1
      %s102 = scalar_select %p99, %s100, %s101
      %p105 = pneg %p99
      %p106 = scmp.eq.s32.totalorder %s22, 3
      %p107 = por %p105, %p106
      %p108 = scmp.ne.s32.totalorder %s100, %s103
      %p109 = scmp.eq.s32.totalorder %s22, 0
      %p110 = por %p108, %p109
      %p111 = scmp.ne.s32.totalorder %s100, %s103
      %p112 = scmp.eq.s32.totalorder %s27, 3
      %p113 = por %p111, %p112
      %p114 = scmp.ne.s32.totalorder %s103, %s104
      %p115 = scmp.eq.s32.totalorder %s27, 0
      %p116 = por %p114, %p115
      %p117 = scmp.ne.s32.totalorder %s103, %s104
      %p118 = scmp.eq.s32.totalorder %s28, 3
      %p119 = por %p117, %p118
      %p121 = scmp.ne.s32.totalorder %s104, %s120
      %p122 = scmp.eq.s32.totalorder %s28, 0
      %p123 = por %p121, %p122
      %s124 = sadd.s32 %s29, %s30
      %s125 = sadd.s32 %s41, %s37
      %s126 = ssub.s32 %s124, %s125
      %p127 = scmp.eq.s32.totalorder %s126, 0
      %s129 = sadd.s32 %s128, 1
      %s130 = scalar_select %p127, %s128, %s129
      %p133 = pneg %p127
      %p134 = scmp.eq.s32.totalorder %s22, 3
      %p135 = por %p133, %p134
      %p136 = scmp.ne.s32.totalorder %s128, %s131
      %p137 = scmp.eq.s32.totalorder %s22, 0
      %p138 = por %p136, %p137
      %p139 = scmp.ne.s32.totalorder %s128, %s131
      %p140 = scmp.eq.s32.totalorder %s27, 3
      %p141 = por %p139, %p140
      %p142 = scmp.ne.s32.totalorder %s131, %s132
      %p143 = scmp.eq.s32.totalorder %s27, 0
      %p144 = por %p142, %p143
      %p145 = scmp.ne.s32.totalorder %s131, %s132
      %p146 = scmp.eq.s32.totalorder %s28, 3
      %p147 = por %p145, %p146
      %p149 = scmp.ne.s32.totalorder %s132, %s148
      %p150 = scmp.eq.s32.totalorder %s28, 0
      %p151 = por %p149, %p150
      %p152 = scmp.le.s32.totalorder 1, %s22
      %p153 = scmp.lt.s32.totalorder %s22, 5
      %p154 = pnand %p152, %p153
      %p155 = pneg %p154
      // Predicated region
      $region9: #{tpu_custom_call.1} parent=5 // pred_check
        _
      $region10: #{tpu_custom_call.1} parent=5 // pred_check_branch
        %157 = sbr.rel (%p154) target = $region12
      $region11: #{tpu_custom_call.1} parent=5 // pred_region
        %s158 = ssub.s32 %s22, 1
      $region12: #{tpu_custom_call.1} parent=5 // pred_fallthru
        _
      %p159 = scmp.lt.s32.totalorder %s22, 4
      // Predicated region
      $region13: #{tpu_custom_call.1} parent=5 // pred_check
        %p160 = pneg %p159
      $region14: #{tpu_custom_call.1} parent=5 // pred_check_branch
        %162 = sbr.rel (%p160) target = $region16
      $region15: #{tpu_custom_call.1} parent=5 // pred_region
        // Predicated region
        $region17: #{tpu_custom_call.1} parent=15 // pred_check
          %p163 = pneg %p56
        $region18: #{tpu_custom_call.1} parent=15 // pred_check_branch
          %165 = sbr.rel (%p163) target = $region20
        $region19: #{tpu_custom_call.1} parent=15 // pred_region
          %s166 = sand.u32 %s46, 1
          %s167 = scalar_lea.sflag [#allocation3], %s166
          %s168 = sand.u32 %s46, 1
          %s169 = smul.addr %s168, 16
          %s170 = scalar_lea.vmem [#allocation2], %s169
          %s171 = smul.u32 4, %s30
          %s173 = ssub.s32 256, 256
          %174 = vsyncadd %s167, %s173
          %s175 = smul.addr %s29, 4
          %s176 = sadd.s32 %s171, %s175
          %s177 = smul.addr %s176, 64
          %s178 = scalar_lea.hbm %s0, %s177
          %s179 = sshll.u32 %s170, 4
          %s180 = int_to_ptr.vmem [resolvable:$true] %s179
          %185 = dma.hbm_to_vmem [thread:$0]  %s178, 256, %s180, %s167, 64, 64, 4
        $region20: #{tpu_custom_call.1} parent=15 // pred_fallthru
          _
        // Predicated region
        $region21: #{tpu_custom_call.1} parent=15 // pred_check
          %p186 = pneg %p82
        $region22: #{tpu_custom_call.1} parent=15 // pred_check_branch
          %188 = sbr.rel (%p186) target = $region24
        $region23: #{tpu_custom_call.1} parent=15 // pred_region
          %s189 = sand.u32 %s72, 1
          %s190 = scalar_lea.sflag [#allocation6], %s189
          %s191 = sand.u32 %s72, 1
          %s192 = smul.addr %s191, 16
          %s193 = scalar_lea.vmem [#allocation5], %s192
          %s195 = ssub.s32 256, 256
          %196 = vsyncadd %s190, %s195
          %s197 = smul.addr %s29, 4
          %s198 = smul.addr %s197, 64
          %s199 = scalar_lea.hbm %s1, %s198
          %s200 = sshll.u32 %s193, 4
          %s201 = int_to_ptr.vmem [resolvable:$true] %s200
          %206 = dma.hbm_to_vmem [thread:$0]  %s199, 256, %s201, %s190, 64, 64, 4
        $region24: #{tpu_custom_call.1} parent=15 // pred_fallthru
          _
      $region16: #{tpu_custom_call.1} parent=5 // pred_fallthru
        _
      %p207 = scmp.le.s32.totalorder 1, %s22
      %p208 = scmp.lt.s32.totalorder %s22, 5
      %p209 = pnand %p207, %p208
      %p210 = pneg %p209
      // Predicated region
      $region25: #{tpu_custom_call.1} parent=5 // pred_check
        _
      $region26: #{tpu_custom_call.1} parent=5 // pred_check_branch
        %212 = sbr.rel (%p209) target = $region28
      $region27: #{tpu_custom_call.1} parent=5 // pred_region
        %s213 = ssub.s32 %s22, 1
        %s214 = sand.u32 %s49, 1
        %s215 = scalar_lea.sflag [#allocation3], %s214
        %s216 = sand.u32 %s49, 1
        %s217 = smul.addr %s216, 16
        %s218 = scalar_lea.vmem [#allocation2], %s217
        // Predicated region
        $region29: #{tpu_custom_call.1} parent=27 // pred_check
          %p219 = pneg %p62
        $region30: #{tpu_custom_call.1} parent=27 // pred_check_branch
          %221 = sbr.rel (%p219) target = $region32
        $region31: #{tpu_custom_call.1} parent=27 // pred_region
          %222 = dma.done %s215, 256
        $region32: #{tpu_custom_call.1} parent=27 // pred_fallthru
          _
        %s223 = sand.u32 %s75, 1
        %s224 = scalar_lea.sflag [#allocation6], %s223
        %s225 = sand.u32 %s75, 1
        %s226 = smul.addr %s225, 16
        %s227 = scalar_lea.vmem [#allocation5], %s226
        // Predicated region
        $region33: #{tpu_custom_call.1} parent=27 // pred_check
          %p228 = pneg %p88
        $region34: #{tpu_custom_call.1} parent=27 // pred_check_branch
          %230 = sbr.rel (%p228) target = $region36
        $region35: #{tpu_custom_call.1} parent=27 // pred_region
          %231 = dma.done %s224, 256
        $region36: #{tpu_custom_call.1} parent=27 // pred_fallthru
          _
        %s232 = sand.u32 %s49, 1
        %s233 = scalar_lea.sflag [#allocation3], %s232
        %s234 = sand.u32 %s49, 1
        %s235 = smul.addr %s234, 16
        %s236 = scalar_lea.vmem [#allocation2], %s235
        %p237 = pneg %p62
        %p238 = pneg %p59
        %s239 = sand.u32 %s75, 1
        %s240 = scalar_lea.sflag [#allocation6], %s239
        %s241 = sand.u32 %s75, 1
        %s242 = smul.addr %s241, 16
        %s243 = scalar_lea.vmem [#allocation5], %s242
        %p244 = pneg %p88
        %p245 = pneg %p85
        %p246 = pneg %p116
        %p247 = pneg %p113
        %s248 = sand.u32 %s103, 1
        %s249 = scalar_lea.sflag [#allocation4], %s248
        %s250 = sand.u32 %s103, 1
        %s251 = smul.addr %s250, 16
        %s252 = scalar_lea.vmem [#allocation7], %s251
        %p253 = pneg %p144
        %p254 = pneg %p141
        %s255 = sand.u32 %s131, 1
        %s256 = scalar_lea.sflag [#allocation9], %s255
        %s257 = sand.u32 %s131, 1
        %s258 = smul.addr %s257, 8
        %s259 = scalar_lea.vmem [#allocation8], %s258
        %s260 = smul.u32 4, %s32
        %s261 = smul.u32 4, %s32
        %s262 = sadd.s32 %s31, %s32
        %v264 = vld [vmem:[%s218] sm:$0xf]
        %v265 = vld [vmem:[%s218 + $0x4] sm:$0xf]
        %v266 = vld [vmem:[%s218 + $0x8] sm:$0xf]
        %v267 = vld [vmem:[%s218 + $0xc] sm:$0xf]
        %v268 = vld [vmem:[%s227] sm:$0xf]
        %v269 = vld [vmem:[%s227 + $0x4] sm:$0xf]
        %v270 = vld [vmem:[%s227 + $0x8] sm:$0xf]
        %v271 = vld [vmem:[%s227 + $0xc] sm:$0xf]
        %v276 = vunpack.c.l.b16 %v264
        %v277 = vunpack.c.l.b16 %v265
        %v278 = vunpack.c.l.b16 %v266
        %v279 = vunpack.c.l.b16 %v267
        %v280 = vpack.c.b16 %v277, %v276
        %v281 = vpack.c.b16 %v279, %v278
        %v286 = vunpack.c.l.b16 %v268
        %v287 = vunpack.c.l.b16 %v269
        %v288 = vunpack.c.l.b16 %v270
        %v289 = vunpack.c.l.b16 %v271
        %v290 = vpack.c.b16 %v287, %v286
        %v291 = vpack.c.b16 %v289, %v288
        %vm294 = vcmask 261120
        %v296 = vsel %vm294, %v280, 0
        %v299 = vsel %vm294, %v281, 0
        %301 = vmatprep.subr.bf16.mxu0 0
        %302 = vmatpush1.bf16.msra.mxu0 %v290
        %303 = vmatprep.subr.bf16.mxu0 0
        %304 = vmatpush1.bf16.msra.mxu0 %v291
        %305 = vmatprep.subr.bf16.mxu0 0
        %306 = vmatpush1.bf16.msra.mxu0 0
        %307 = vmatprep.subr.bf16.mxu0 0
        %308 = vmatpush1.bf16.msra.mxu0 0
        %309 = vmatprep.subr.bf16.mxu0 0
        %310 = vmatpush1.bf16.msra.mxu0 0
        %311 = vmatprep.subr.bf16.mxu0 0
        %312 = vmatpush1.bf16.msra.mxu0 0
        %313 = vmatprep.subr.bf16.mxu0 0
        %314 = vmatpush1.bf16.msra.mxu0 0
        %315 = vmatprep.subr.bf16.mxu0 0
        %316 = vmatpush1.bf16.msra.mxu0 0
        %317 = vmatprep.subr.bf16.mxu0 0
        %318 = vmatpush1.bf16.msra.mxu0 0
        %319 = vmatprep.subr.bf16.mxu0 0
        %320 = vmatpush1.bf16.msra.mxu0 0
        %321 = vmatprep.subr.bf16.mxu0 0
        %322 = vmatpush1.bf16.msra.mxu0 0
        %323 = vmatprep.subr.bf16.mxu0 0
        %324 = vmatpush1.bf16.msra.mxu0 0
        %325 = vmatprep.subr.bf16.mxu0 0
        %326 = vmatpush1.bf16.msra.mxu0 0
        %327 = vmatprep.subr.bf16.mxu0 0
        %328 = vmatpush1.bf16.msra.mxu0 0
        %329 = vmatprep.subr.bf16.mxu0 0
        %330 = vmatpush1.bf16.msra.mxu0 0
        %331 = vmatprep.subr.bf16.mxu0 0
        %332 = vmatpush1.bf16.msra.mxu0 0
        %333 = vmatprep.mubr.bf16.mxu0 0
        %334 = vmatmul.mubr.bf16.gmra.mrb[0].mxu0 %v296
        %v335 = vpop.f32.mrb[0].mxu0
        %v336 = vadd.f32 0.0, %v335
        %v337 = vpop.f32.mrb[0].mxu0
        %v338 = vpop.f32.mrb[0].mxu0
        %v339 = vadd.f32 0.0, %v338
        %v340 = vpop.f32.mrb[0].mxu0
        %341 = vmatprep.mubr.bf16.mxu0 0
        %342 = vmatmul.mubr.bf16.gmra.mrb[0].mxu0 %v299
        %v343 = vpop.f32.mrb[0].mxu0
        %v344 = vadd.f32 0.0, %v343
        %v345 = vpop.f32.mrb[0].mxu0
        %v346 = vpop.f32.mrb[0].mxu0
        %v347 = vadd.f32 0.0, %v346
        %v348 = vpop.f32.mrb[0].mxu0
        %349 = vdwg.mxu0
        %v350 = vpack.c.bf16 %v339, %v336
        %v351 = vpack.c.bf16 %v347, %v344
        %v354 = vunpack.c.l.b16 %v350
        %v355 = vunpack.c.h.b16 %v350
        %v356 = vunpack.c.l.b16 %v351
        %v357 = vunpack.c.h.b16 %v351
        %v358 = vpack.c.b16 %v354, %v354
        %v359 = vpack.c.b16 %v355, %v355
        %v360 = vpack.c.b16 %v356, %v356
        %v361 = vpack.c.b16 %v357, %v357
        %366 = vst [vmem:[%s252] sm:$0xf] %v358
        %367 = vst [vmem:[%s252 + $0x4] sm:$0xf] %v359
        %368 = vst [vmem:[%s252 + $0x8] sm:$0xf] %v360
        %369 = vst [vmem:[%s252 + $0xc] sm:$0xf] %v361
        %v370 = vadd.f32 %v336, %v339
        %v371 = vadd.f32 %v370, %v344
        %v372 = vadd.f32 %v371, %v347
        %v373 = vrot.slane %v372, 4
        %v374 = vadd.f32 %v372, %v373
        %v375 = vrot.slane %v374, 2
        %v376 = vadd.f32 %v374, %v375
        %v377 = vrot.slane %v376, 1
        %v378 = vadd.f32 %v376, %v377
        %v379 = vmul.f32 %v336, %v336
        %v380 = vmul.f32 %v339, %v339
        %v381 = vmul.f32 %v344, %v344
        %v382 = vmul.f32 %v347, %v347
        %v383 = vadd.f32 %v379, %v380
        %v384 = vadd.f32 %v383, %v381
        %v385 = vadd.f32 %v384, %v382
        %v386 = vrot.slane %v385, 4
        %v387 = vadd.f32 %v385, %v386
        %v388 = vrot.slane %v387, 2
        %v389 = vadd.f32 %v387, %v388
        %v390 = vrot.slane %v389, 1
        %v391 = vadd.f32 %v389, %v390
        %v392 = vlaneseq
        %v393 = vshrl.u32 %v392, 7
        %vm394 = vcmp.eq.s32.totalorder %v393, 0
        %vm395 = vcmp.eq.s32.totalorder %v393, 1
        %v396 = vsel %vm395, %v391, 0.0
        %v397 = vsel %vm394, %v378, %v396
        %398 = vst [vmem:[%s259] sm:$0xff] %v397
        %s399 = sand.u32 %s103, 1
        %s400 = scalar_lea.sflag [#allocation4], %s399
        %s401 = sand.u32 %s103, 1
        %s402 = smul.addr %s401, 16
        %s403 = scalar_lea.vmem [#allocation7], %s402
        %s404 = sand.u32 %s131, 1
        %s405 = scalar_lea.sflag [#allocation9], %s404
        %s406 = sand.u32 %s131, 1
        %s407 = smul.addr %s406, 8
        %s408 = scalar_lea.vmem [#allocation8], %s407
        // Predicated region
        $region37: #{tpu_custom_call.1} parent=27 // pred_check
          %p409 = pneg %p113
        $region38: #{tpu_custom_call.1} parent=27 // pred_check_branch
          %411 = sbr.rel (%p409) target = $region40
        $region39: #{tpu_custom_call.1} parent=27 // pred_region
          %s412 = smul.u32 4, %s32
          %s414 = ssub.s32 256, 256
          %415 = vsyncadd %s400, %s414
          %s416 = smul.addr %s31, 4
          %s417 = sadd.s32 %s412, %s416
          %s418 = smul.addr %s417, 64
          %s419 = scalar_lea.hbm %s2, %s418
          %s420 = sshll.u32 %s403, 4
          %s421 = int_to_ptr.vmem [resolvable:$true] %s420
          %426 = dma.vmem_to_hbm [thread:$0]  %s421, 256, %s419, %s400, 64, 64, 4
        $region40: #{tpu_custom_call.1} parent=27 // pred_fallthru
          _
        // Predicated region
        $region41: #{tpu_custom_call.1} parent=27 // pred_check
          %p427 = pneg %p141
        $region42: #{tpu_custom_call.1} parent=27 // pred_check_branch
          %429 = sbr.rel (%p427) target = $region44
        $region43: #{tpu_custom_call.1} parent=27 // pred_region
          %s430 = sadd.s32 %s31, %s32
          %s432 = ssub.s32 128, 128
          %433 = vsyncadd %s405, %s432
          %s434 = smul.addr %s430, 128
          %s435 = scalar_lea.hbm %s3, %s434
          %s437 = sshll.u32 %s408, 4
          %s438 = int_to_ptr.vmem [resolvable:$true] %s437
          %440 = dma.vmem_to_hbm [thread:$0]  %s438, 128, %s435, %s405
        $region44: #{tpu_custom_call.1} parent=27 // pred_fallthru
          _
      $region28: #{tpu_custom_call.1} parent=5 // pred_fallthru
        _
      %p441 = scmp.le.s32.totalorder 2, %s22
      // Predicated region
      $region45: #{tpu_custom_call.1} parent=5 // pred_check
        %p442 = pneg %p441
      $region46: #{tpu_custom_call.1} parent=5 // pred_check_branch
        %444 = sbr.rel (%p442) target = $region48
      $region47: #{tpu_custom_call.1} parent=5 // pred_region
        %s445 = ssub.s32 %s22, 2
        // Predicated region
        $region49: #{tpu_custom_call.1} parent=47 // pred_check
          %p446 = pneg %p119
        $region50: #{tpu_custom_call.1} parent=47 // pred_check_branch
          %448 = sbr.rel (%p446) target = $region52
        $region51: #{tpu_custom_call.1} parent=47 // pred_region
          %s449 = sand.u32 %s104, 1
          %s450 = scalar_lea.sflag [#allocation4], %s449
          %s451 = sand.u32 %s104, 1
          %s452 = smul.addr %s451, 16
          %s453 = scalar_lea.vmem [#allocation7], %s452
          %454 = dma.done %s450, 256
        $region52: #{tpu_custom_call.1} parent=47 // pred_fallthru
          _
        // Predicated region
        $region53: #{tpu_custom_call.1} parent=47 // pred_check
          %p455 = pneg %p147
        $region54: #{tpu_custom_call.1} parent=47 // pred_check_branch
          %457 = sbr.rel (%p455) target = $region56
        $region55: #{tpu_custom_call.1} parent=47 // pred_region
          %s458 = sand.u32 %s132, 1
          %s459 = scalar_lea.sflag [#allocation9], %s458
          %s460 = sand.u32 %s132, 1
          %s461 = smul.addr %s460, 8
          %s462 = scalar_lea.vmem [#allocation8], %s461
          %463 = dma.done %s459, 128
        $region56: #{tpu_custom_call.1} parent=47 // pred_fallthru
          _
      $region48: #{tpu_custom_call.1} parent=5 // pred_fallthru
        _
    $region6: #{tpu_custom_call.1} parent=1 // loop_footer
      %s26 = sadd.s32 1, %s22
    $region7: #{tpu_custom_call.1} parent=1 // loop_footer_branch
      %21 = sbr.rel target = $region3
    $region8: #{tpu_custom_call.1} parent=1 // loop_exit
      _
    %464 = vsyncpa [#allocation3], 1
    %s465 = scalar_lea.sflag [#allocation3], 1
    %466 = vsyncpa %s465, 1
    %467 = vsyncpa [#allocation6], 1
    %s468 = scalar_lea.sflag [#allocation6], 1
    %469 = vsyncpa %s468, 1
    %470 = vsyncpa [#allocation4], 1
    %s471 = scalar_lea.sflag [#allocation4], 1
    %472 = vsyncpa %s471, 1
    %473 = vsyncpa [#allocation9], 1
    %s474 = scalar_lea.sflag [#allocation9], 1
    %475 = vsyncpa %s474, 1

</llo_original>
